<compile_context>
chip_gen: v6e
topology: v6e:2x2x1
jax: 0.10.0
libtpu: 0.0.40
codegen_flags: <defaults>
</compile_context>

<pallas_src>
import functools

import jax
import jax.numpy as jnp
from jax.experimental import pallas as pl
from jax.experimental.pallas import tpu as pltpu


def head_kernel(x_ref, w1_ref, b1_ref, w2_ref, b2_ref, o_ref):
    # dropout (identity, eval) -> dense -> tanh -> dropout (identity) -> out_proj
    x = x_ref[...].astype(jnp.bfloat16)                                 # in-kernel cast
    h = jnp.dot(x, w1_ref[...], preferred_element_type=jnp.float32)     # MXU, f32 acc
    h = jnp.tanh(h + b1_ref[...])                                       # f32 bias + tanh (EUP)
    y = jnp.dot(h.astype(jnp.bfloat16), w2_ref[...],
                preferred_element_type=jnp.float32)                     # MXU, f32 acc
    o_ref[...] = (y + b2_ref[...]).astype(o_ref.dtype)


def _round_up(x, m):
    return ((x + m - 1) // m) * m


def _batch_tiling(B, max_tile_b):
    """Balanced, 16-row-aligned batch tiles; >=2 tiles for large B (v7x megacore)."""
    n_tiles = pl.cdiv(B, max_tile_b)
    if B >= 256:
        n_tiles = max(2, n_tiles)          # keep both v7x TensorCores busy
    tile_b = _round_up(pl.cdiv(B, n_tiles), 16)
    B_pad = _round_up(B, tile_b)           # over-padding now bounded by tile rounding
    grid_b = B_pad // tile_b
    return tile_b, B_pad, grid_b


def prepare_head_params(w_dense, b_dense, w_out, b_out):
    """One-time weight preprocessing: bf16 matmul operands, lane-padded out_proj.

    Weights are (in_features, out_features), i.e. transposed vs PyTorch nn.Linear.
    Call once and cache the result; the per-call wrapper does no weight work.
    """
    E1, E2 = w_dense.shape
    NL = w_out.shape[1]
    NL_pad = _round_up(NL, 128)            # lane-dense output -> unmasked vst

    w1 = jnp.asarray(w_dense, dtype=jnp.bfloat16)
    b1 = jnp.asarray(b_dense, dtype=jnp.float32).reshape(1, E2)
    w2 = jnp.pad(jnp.asarray(w_out, dtype=jnp.bfloat16), ((0, 0), (0, NL_pad - NL)))
    b2 = jnp.pad(jnp.asarray(b_out, dtype=jnp.float32).reshape(1, NL),
                 ((0, 0), (0, NL_pad - NL)))
    return {"w1": w1, "b1": b1, "w2": w2, "b2": b2, "num_labels": NL}


@functools.partial(jax.jit, static_argnames=("num_labels", "max_tile_b", "out_dtype"))
def apply_head(x, w1, b1, w2, b2, *, num_labels, max_tile_b=512, out_dtype=jnp.float32):
    """x: [B, E1] (native dtype); preprocessed params from prepare_head_params."""
    B, E1 = x.shape
    E2 = w1.shape[1]
    NL_pad = w2.shape[1]

    tile_b, B_pad, grid_b = _batch_tiling(B, max_tile_b)
    x_p = x if B_pad == B else jnp.pad(x, ((0, B_pad - B), (0, 0)))

    # Advisory cost hint so XLA schedules this tiny custom call sensibly.
    cost = pl.CostEstimate(
        flops=2 * B_pad * E1 * E2 + 2 * B_pad * E2 * NL_pad,
        transcendentals=B_pad * E2,
        bytes_accessed=(x_p.size * x_p.dtype.itemsize
                        + w1.size * 2 + w2.size * 2 + b1.size * 4 + b2.size * 4
                        + B_pad * NL_pad * jnp.dtype(out_dtype).itemsize),
    )

    out = pl.pallas_call(
        head_kernel,
        out_shape=jax.ShapeDtypeStruct((B_pad, NL_pad), out_dtype),
        grid_spec=pltpu.PrefetchScalarGridSpec(
            num_scalar_prefetch=0,
            grid=(grid_b,),
            in_specs=[
                # x streams over the batch (default double-buffered).
                pl.BlockSpec((tile_b, E1), lambda i: (i, 0)),
                # Grid-invariant weights/biases: single-buffered (half the VMEM).
                pl.BlockSpec((E1, E2), lambda i: (0, 0),
                             pipeline_mode=pl.Buffered(1)),
                pl.BlockSpec((1, E2), lambda i: (0, 0),
                             pipeline_mode=pl.Buffered(1)),
                pl.BlockSpec((E2, NL_pad), lambda i: (0, 0),
                             pipeline_mode=pl.Buffered(1)),
                pl.BlockSpec((1, NL_pad), lambda i: (0, 0),
                             pipeline_mode=pl.Buffered(1)),
            ],
            out_specs=pl.BlockSpec((tile_b, NL_pad), lambda i: (i, 0)),
        ),
        compiler_params=pltpu.CompilerParams(
            dimension_semantics=("parallel",),        # batch axis is data-parallel
            vmem_limit_bytes=32 * 1024 * 1024,        # fits v7x 64 MiB / v5e-v6e 128 MiB
        ),
        cost_estimate=cost,
    )(x_p, w1, b1, w2, b2)

    # Strip batch / label padding.
    return out[:B, :num_labels]


def roberta_classification_head(x, w_dense, b_dense, w_out, b_out, **kw):
    """Convenience one-shot wrapper (preprocess + apply). Cache params for hot loops."""
    p = prepare_head_params(w_dense, b_dense, w_out, b_out)
    return apply_head(x, p["w1"], p["b1"], p["w2"], p["b2"],
                      num_labels=p["num_labels"], **kw)


def reference(x, w_dense, b_dense, w_out, b_out):
    # Matches the kernel's numerics: bf16 matmul operands, f32 accumulation,
    # f32 bias add and tanh. (A full-f32 head differs by ~1e-2 rel due to bf16.)
    h = jnp.dot(x.astype(jnp.bfloat16), w_dense.astype(jnp.bfloat16),
                preferred_element_type=jnp.float32) + b_dense
    h = jnp.tanh(h)
    y = jnp.dot(h.astype(jnp.bfloat16), w_out.astype(jnp.bfloat16),
                preferred_element_type=jnp.float32) + b_out
    return y


if __name__ == "__main__":
    # Small shapes consistent with the module's forward:
    # embedding_size1=32, embedding_size2=64, num_labels=4, batch=16.
    B, E1, E2, NL = 16, 32, 64, 4

    key = jax.random.PRNGKey(0)
    kx, kw1, kb1, kw2, kb2 = jax.random.split(key, 5)

    x = jax.random.normal(kx, (B, E1), dtype=jnp.float32)
    # Deterministic synthetic parameters, stored (in_features, out_features).
    w_dense = jax.random.normal(kw1, (E1, E2), dtype=jnp.float32) * 0.02
    b_dense = jax.random.normal(kb1, (1, E2), dtype=jnp.float32) * 0.02
    w_out = jax.random.normal(kw2, (E2, NL), dtype=jnp.float32) * 0.02
    b_out = jax.random.normal(kb2, (1, NL), dtype=jnp.float32) * 0.02

    # Preprocess weights once (cached), then apply the kernel.
    params = prepare_head_params(w_dense, b_dense, w_out, b_out)
    out = apply_head(x, params["w1"], params["b1"], params["w2"], params["b2"],
                     num_labels=params["num_labels"])
    out = jax.block_until_ready(out)

    ref = reference(x, w_dense, b_dense, w_out, b_out)
    assert out.shape == (B, NL)
    assert jnp.allclose(out, ref, atol=1e-4, rtol=1e-3), "mismatch vs reference"

    print("KERNEL_OK")
</pallas_src>

<mosaic_0001>
module attributes {stable_mosaic.version = 11 : i64} {
  func.func @head_kernel(%arg0: i32, %arg1: memref<16x32xf32, #tpu.memory_space<vmem>>, %arg2: memref<32x64xbf16, #tpu.memory_space<vmem>>, %arg3: memref<1x64xf32, #tpu.memory_space<vmem>>, %arg4: memref<64x128xbf16, #tpu.memory_space<vmem>>, %arg5: memref<1x128xf32, #tpu.memory_space<vmem>>, %arg6: memref<16x128xf32, #tpu.memory_space<vmem>>) attributes {dimension_semantics = [#tpu.dimension_semantics<parallel>], iteration_bounds = array<i64: 1>, scalar_prefetch = 0 : i64, scratch_operands = 0 : i64, tpu.core_type = #tpu.core_type<tc>, window_params = [{transform_indices = @transform_0, window_bounds = array<i64: 16, 32>}, {pipeline_mode = #tpu.pipeline_mode<synchronous>, transform_indices = @transform_1, window_bounds = array<i64: 32, 64>}, {pipeline_mode = #tpu.pipeline_mode<synchronous>, transform_indices = @transform_2, window_bounds = array<i64: 1, 64>}, {pipeline_mode = #tpu.pipeline_mode<synchronous>, transform_indices = @transform_3, window_bounds = array<i64: 64, 128>}, {pipeline_mode = #tpu.pipeline_mode<synchronous>, transform_indices = @transform_4, window_bounds = array<i64: 1, 128>}, {transform_indices = @transform_5, window_bounds = array<i64: 16, 128>}]} {
    %c0 = arith.constant 0 : index
    %c0_0 = arith.constant 0 : index
    %0 = vector.load %arg1[%c0, %c0_0] : memref<16x32xf32, #tpu.memory_space<vmem>>, vector<16x32xf32>
    %1 = arith.truncf %0 : vector<16x32xf32> to vector<16x32xbf16>
    %c0_1 = arith.constant 0 : index
    %c0_2 = arith.constant 0 : index
    %2 = vector.load %arg2[%c0_1, %c0_2] : memref<32x64xbf16, #tpu.memory_space<vmem>>, vector<32x64xbf16>
    %cst = arith.constant dense<0.000000e+00> : vector<16x64xf32>
    %3 = tpu.matmul %1, %2, %cst {dimension_numbers = #tpu.dot_dimension_numbers<[1], [0], [0], [1], [0, 0, 1, 1], [], []>} : vector<16x32xbf16>, vector<32x64xbf16>, vector<16x64xf32> -> vector<16x64xf32>
    %c0_3 = arith.constant 0 : index
    %c0_4 = arith.constant 0 : index
    %4 = vector.load %arg3[%c0_3, %c0_4] : memref<1x64xf32, #tpu.memory_space<vmem>>, vector<1x64xf32>
    %5 = vector.broadcast %4 : vector<1x64xf32> to vector<16x64xf32>
    %6 = arith.addf %3, %5 : vector<16x64xf32>
    %7 = math.tanh %6 : vector<16x64xf32>
    %8 = arith.truncf %7 : vector<16x64xf32> to vector<16x64xbf16>
    %c0_5 = arith.constant 0 : index
    %c0_6 = arith.constant 0 : index
    %9 = vector.load %arg4[%c0_5, %c0_6] : memref<64x128xbf16, #tpu.memory_space<vmem>>, vector<64x128xbf16>
    %cst_7 = arith.constant dense<0.000000e+00> : vector<16x128xf32>
    %10 = tpu.matmul %8, %9, %cst_7 {dimension_numbers = #tpu.dot_dimension_numbers<[1], [0], [0], [1], [0, 0, 1, 1], [], []>} : vector<16x64xbf16>, vector<64x128xbf16>, vector<16x128xf32> -> vector<16x128xf32>
    %c0_8 = arith.constant 0 : index
    %c0_9 = arith.constant 0 : index
    %11 = vector.load %arg5[%c0_8, %c0_9] : memref<1x128xf32, #tpu.memory_space<vmem>>, vector<1x128xf32>
    %12 = vector.broadcast %11 : vector<1x128xf32> to vector<16x128xf32>
    %13 = arith.addf %10, %12 : vector<16x128xf32>
    %c0_10 = arith.constant 0 : index
    %c0_11 = arith.constant 0 : index
    %14 = vector.load %arg6[%c0_10, %c0_11] : memref<16x128xf32, #tpu.memory_space<vmem>>, vector<16x128xf32>
    tpu.vector_store %arg6[%c0_10, %c0_11], %13 {strides = array<i32>} : memref<16x128xf32, #tpu.memory_space<vmem>>, vector<16x128xf32>,
    return
  }
  func.func @transform_0(%arg0: i32) -> (i32, i32) {
    %c0_i32 = arith.constant 0 : i32
    %c0_i32_0 = arith.constant 0 : i32
    return %arg0, %c0_i32 : i32, i32
  }
  func.func @transform_1(%arg0: i32) -> (i32, i32) {
    %c0_i32 = arith.constant 0 : i32
    %c0_i32_0 = arith.constant 0 : i32
    %c0_i32_1 = arith.constant 0 : i32
    return %c0_i32, %c0_i32_0 : i32, i32
  }
  func.func @transform_2(%arg0: i32) -> (i32, i32) {
    %c0_i32 = arith.constant 0 : i32
    %c0_i32_0 = arith.constant 0 : i32
    %c0_i32_1 = arith.constant 0 : i32
    return %c0_i32, %c0_i32_0 : i32, i32
  }
  func.func @transform_3(%arg0: i32) -> (i32, i32) {
    %c0_i32 = arith.constant 0 : i32
    %c0_i32_0 = arith.constant 0 : i32
    %c0_i32_1 = arith.constant 0 : i32
    return %c0_i32, %c0_i32_0 : i32, i32
  }
  func.func @transform_4(%arg0: i32) -> (i32, i32) {
    %c0_i32 = arith.constant 0 : i32
    %c0_i32_0 = arith.constant 0 : i32
    %c0_i32_1 = arith.constant 0 : i32
    return %c0_i32, %c0_i32_0 : i32, i32
  }
  func.func @transform_5(%arg0: i32) -> (i32, i32) {
    %c0_i32 = arith.constant 0 : i32
    %c0_i32_0 = arith.constant 0 : i32
    return %arg0, %c0_i32 : i32, i32
  }
}

</mosaic_0001>

<llo_original>
// kernel: apply_head.1
$region0: #{apply_head.1}
  #allocation0 [shape = 'u32[]', space=smem, size = 0x4, offset = 0x4, fixed_abs, tag = 'smem constant byte address 0x4 - core index']
  #allocation1 [shape = 'u32[144,128]{1,0:T(1,128)}', space=vmem, size = 0x12000, scoped, tag = 'internal scratch']
  %s0 = inlined_call_operand.hbm [shape: f32[16,32], index: 0, kind: input, shape index: {}]
  %s1 = inlined_call_operand.hbm [shape: bf16[32,64], index: 1, kind: input, shape index: {}]
  %s2 = inlined_call_operand.vmem [shape: f32[1,64], index: 2, kind: input, shape index: {}]
  %s3 = inlined_call_operand.hbm [shape: bf16[64,128], index: 3, kind: input, shape index: {}]
  %s4 = inlined_call_operand.vmem [shape: f32[1,128], index: 4, kind: input, shape index: {}]
  %s5 = inlined_call_operand.vmem [shape: f32[16,128], index: 5, kind: output, shape index: {}]
  %s6 = sld [smem:[#allocation0]]
  $region42: #{apply_head.1} parent=0
    _
  %s8 = ssub.s32 1, %s6
  %s9 = scalar_select 0, %s8, %s6
  $region1: #{apply_head.1} parent=0
    #allocation2 [shape = 'u8[8192]{0}', space=vmem, size = 0x2000, scoped, tag = 'input window, operand 0, single buffered']
    #allocation3 [shape = 's32[1]{0}', space=sflag, size = 0x4, scoped, tag = 'scoped memory for apply_head.1']
    #allocation4 [shape = 'u8[8192]{0}', space=vmem, size = 0x2000, scoped, tag = 'input window, operand 1, single buffered']
    #allocation5 [shape = 's32[1]{0}', space=sflag, size = 0x4, scoped, tag = 'scoped memory for apply_head.1']
    #allocation6 [shape = 'u8[16384]{0}', space=vmem, size = 0x4000, scoped, tag = 'input window, operand 3, single buffered']
    %10 = vsyncpa [#allocation3], 0
    %11 = vsyncpa [#allocation5], 0
    // Predicated region
    $region2: #{apply_head.1} parent=1 // pred_check
      _
    $region3: #{apply_head.1} parent=1 // pred_check_branch
      %13 = sbr.rel (0) target = $region5
    $region4: #{apply_head.1} parent=1 // pred_region
      %s15 = ssub.s32 256, 256
      %16 = vsyncadd [#allocation3], %s15
      %s17 = sshll.u32 [#allocation2], 4
      %s18 = int_to_ptr.vmem [resolvable:$true] %s17
      %23 = dma.hbm_to_vmem [thread:$0]  %s0, 256, %s18, [#allocation3], 128, 128, 8
    $region5: #{apply_head.1} parent=1 // pred_fallthru
      _
    // Predicated region
    $region6: #{apply_head.1} parent=1 // pred_check
      _
    $region7: #{apply_head.1} parent=1 // pred_check_branch
      %25 = sbr.rel (0) target = $region9
    $region8: #{apply_head.1} parent=1 // pred_region
      %s27 = ssub.s32 256, 256
      %28 = vsyncadd [#allocation5], %s27
      %s29 = sshll.u32 [#allocation4], 4
      %s30 = int_to_ptr.vmem [resolvable:$true] %s29
      %35 = dma.hbm_to_vmem [thread:$0]  %s1, 256, %s30, [#allocation5], 64, 64, 4
    $region9: #{apply_head.1} parent=1 // pred_fallthru
      _
    // Predicated region
    $region10: #{apply_head.1} parent=1 // pred_check
      _
    $region11: #{apply_head.1} parent=1 // pred_check_branch
      %37 = sbr.rel (0) target = $region13
    $region12: #{apply_head.1} parent=1 // pred_region
      _
    $region13: #{apply_head.1} parent=1 // pred_fallthru
      _
    // Predicated region
    $region14: #{apply_head.1} parent=1 // pred_check
      _
    $region15: #{apply_head.1} parent=1 // pred_check_branch
      %39 = sbr.rel (0) target = $region17
    $region16: #{apply_head.1} parent=1 // pred_region
      %s41 = ssub.s32 512, 512
      %42 = vsyncadd [#allocation5], %s41
      %s43 = sshll.u32 [#allocation6], 4
      %s44 = int_to_ptr.vmem [resolvable:$true] %s43
      %49 = dma.hbm_to_vmem [thread:$0]  %s3, 512, %s44, [#allocation5], 64, 64, 4
    $region17: #{apply_head.1} parent=1 // pred_fallthru
      _
    // Predicated region
    $region18: #{apply_head.1} parent=1 // pred_check
      _
    $region19: #{apply_head.1} parent=1 // pred_check_branch
      %51 = sbr.rel (0) target = $region21
    $region20: #{apply_head.1} parent=1 // pred_region
      _
    $region21: #{apply_head.1} parent=1 // pred_fallthru
      _
    // Predicated region
    $region22: #{apply_head.1} parent=1 // pred_check
      _
    $region23: #{apply_head.1} parent=1 // pred_check_branch
      %53 = sbr.rel (0) target = $region25
    $region24: #{apply_head.1} parent=1 // pred_region
      %54 = dma.done [#allocation3], 256
    $region25: #{apply_head.1} parent=1 // pred_fallthru
      _
    // Predicated region
    $region26: #{apply_head.1} parent=1 // pred_check
      _
    $region27: #{apply_head.1} parent=1 // pred_check_branch
      %56 = sbr.rel (0) target = $region29
    $region28: #{apply_head.1} parent=1 // pred_region
      %57 = dma.done [#allocation5], 256
    $region29: #{apply_head.1} parent=1 // pred_fallthru
      _
    // Predicated region
    $region30: #{apply_head.1} parent=1 // pred_check
      _
    $region31: #{apply_head.1} parent=1 // pred_check_branch
      %59 = sbr.rel (0) target = $region33
    $region32: #{apply_head.1} parent=1 // pred_region
      %60 = dma.done [#allocation5], 512
    $region33: #{apply_head.1} parent=1 // pred_fallthru
      _
    %v62 = vld [vmem:[#allocation2] sm:$0xff]
    %v63 = vld [vmem:[#allocation2 + $0x8] sm:$0xff]
    %v64 = vpack.c.bf16 %v63, %v62
    %v65 = vld [vmem:[#allocation4] sm:$0xf]
    %v66 = vld [vmem:[#allocation4 + $0x4] sm:$0xf]
    %v67 = vld [vmem:[#allocation4 + $0x8] sm:$0xf]
    %v68 = vld [vmem:[#allocation4 + $0xc] sm:$0xf]
    %v69 = vld [vmem:[%s2] sm:$0x1]
    %v71 = vlaneseq
    %v72 = vshrl.u32 %v71, 7
    %v73 = vsub.s32 0, %v72
    %v74 = vrot.slane %v69, %v73
    %v80 = vunpack.c.l.b16 %v65
    %v81 = vunpack.c.l.b16 %v66
    %v82 = vunpack.c.l.b16 %v67
    %v83 = vunpack.c.l.b16 %v68
    %v84 = vpack.c.b16 %v81, %v80
    %v85 = vpack.c.b16 %v83, %v82
    %vm88 = vcmask 261120
    %v90 = vsel %vm88, %v64, 0
    %92 = vmatprep.subr.bf16.mxu0 0
    %93 = vmatpush1.bf16.msra.mxu0 0
    %94 = vmatprep.subr.bf16.mxu0 0
    %95 = vmatpush1.bf16.msra.mxu0 0
    %96 = vmatprep.subr.bf16.mxu0 0
    %97 = vmatpush1.bf16.msra.mxu0 0
    %98 = vmatprep.subr.bf16.mxu0 0
    %99 = vmatpush1.bf16.msra.mxu0 0
    %100 = vmatprep.subr.bf16.mxu0 0
    %101 = vmatpush1.bf16.msra.mxu0 0
    %102 = vmatprep.subr.bf16.mxu0 0
    %103 = vmatpush1.bf16.msra.mxu0 0
    %104 = vmatprep.subr.bf16.mxu0 0
    %105 = vmatpush1.bf16.msra.mxu0 %v85
    %106 = vmatprep.subr.bf16.mxu0 0
    %107 = vmatpush1.bf16.msra.mxu0 %v84
    %108 = vmatprep.subr.bf16.mxu0 0
    %109 = vmatpush2.bf16.msra.mxu0 0
    %110 = vmatprep.subr.bf16.mxu0 0
    %111 = vmatpush2.bf16.msra.mxu0 0
    %112 = vmatprep.subr.bf16.mxu0 0
    %113 = vmatpush2.bf16.msra.mxu0 0
    %114 = vmatprep.subr.bf16.mxu0 0
    %115 = vmatpush2.bf16.msra.mxu0 0
    %116 = vmatprep.subr.bf16.mxu0 0
    %117 = vmatpush2.bf16.msra.mxu0 0
    %118 = vmatprep.subr.bf16.mxu0 0
    %119 = vmatpush2.bf16.msra.mxu0 0
    %120 = vmatprep.subr.bf16.mxu0 0
    %121 = vmatpush2.bf16.msra.mxu0 0
    %122 = vmatprep.subr.bf16.mxu0 0
    %123 = vmatpush2.bf16.msra.mxu0 0
    %124 = vmatprep.mubr.bf16.mxu0 0
    %125 = vmatmul.mubr.bf16.gmra.mxu0 %v90
    %v126 = vpop.f32.mrf.mxu0
    %v127 = vadd.f32 %v74, %v126
    %v128 = vpop.f32.mrf.mxu0
    %v129 = vpop.f32.mrf.mxu0
    %v130 = vadd.f32 %v74, %v129
    %v131 = vpop.f32.mrf.mxu0
    %132 = vdwg.mxu0
    %v133 = vtanh.pop %v127
    %v134 = vtanh.pop %v130
    %v135 = vpack.c.bf16 %v134, %v133
    %v136 = vld [vmem:[#allocation6] sm:$0xf]
    %v137 = vld [vmem:[#allocation6 + $0x4] sm:$0xf]
    %v138 = vld [vmem:[#allocation6 + $0x8] sm:$0xf]
    %v139 = vld [vmem:[#allocation6 + $0xc] sm:$0xf]
    %v140 = vld [vmem:[#allocation6 + $0x10] sm:$0xf]
    %v141 = vld [vmem:[#allocation6 + $0x14] sm:$0xf]
    %v142 = vld [vmem:[#allocation6 + $0x18] sm:$0xf]
    %v143 = vld [vmem:[#allocation6 + $0x1c] sm:$0xf]
    %v144 = vld [vmem:[%s4] sm:$0x1]
    %v146 = vlaneseq
    %v147 = vshrl.u32 %v146, 7
    %v148 = vsub.s32 0, %v147
    %v149 = vrot.slane %v144, %v148
    %v159 = vunpack.c.l.b16 %v136
    %v160 = vunpack.c.l.b16 %v137
    %v161 = vunpack.c.l.b16 %v138
    %v162 = vunpack.c.l.b16 %v139
    %v163 = vunpack.c.l.b16 %v140
    %v164 = vunpack.c.l.b16 %v141
    %v165 = vunpack.c.l.b16 %v142
    %v166 = vunpack.c.l.b16 %v143
    %v167 = vpack.c.b16 %v160, %v159
    %v168 = vpack.c.b16 %v162, %v161
    %v169 = vpack.c.b16 %v164, %v163
    %v170 = vpack.c.b16 %v166, %v165
    %vm175 = vcmask 523264
    %v177 = vsel %vm175, %v135, 0
    %179 = vmatprep.subr.bf16.mxu0 0
    %180 = vmatpush1.bf16.msra.mxu0 0
    %181 = vmatprep.subr.bf16.mxu0 0
    %182 = vmatpush1.bf16.msra.mxu0 0
    %183 = vmatprep.subr.bf16.mxu0 0
    %184 = vmatpush1.bf16.msra.mxu0 0
    %185 = vmatprep.subr.bf16.mxu0 0
    %186 = vmatpush1.bf16.msra.mxu0 0
    %187 = vmatprep.subr.bf16.mxu0 0
    %188 = vmatpush1.bf16.msra.mxu0 %v170
    %189 = vmatprep.subr.bf16.mxu0 0
    %190 = vmatpush1.bf16.msra.mxu0 %v169
    %191 = vmatprep.subr.bf16.mxu0 0
    %192 = vmatpush1.bf16.msra.mxu0 %v168
    %193 = vmatprep.subr.bf16.mxu0 0
    %194 = vmatpush1.bf16.msra.mxu0 %v167
    %195 = vmatprep.subr.bf16.mxu0 0
    %196 = vmatpush2.bf16.msra.mxu0 0
    %197 = vmatprep.subr.bf16.mxu0 0
    %198 = vmatpush2.bf16.msra.mxu0 0
    %199 = vmatprep.subr.bf16.mxu0 0
    %200 = vmatpush2.bf16.msra.mxu0 0
    %201 = vmatprep.subr.bf16.mxu0 0
    %202 = vmatpush2.bf16.msra.mxu0 0
    %203 = vmatprep.subr.bf16.mxu0 0
    %204 = vmatpush2.bf16.msra.mxu0 0
    %205 = vmatprep.subr.bf16.mxu0 0
    %206 = vmatpush2.bf16.msra.mxu0 0
    %207 = vmatprep.subr.bf16.mxu0 0
    %208 = vmatpush2.bf16.msra.mxu0 0
    %209 = vmatprep.subr.bf16.mxu0 0
    %210 = vmatpush2.bf16.msra.mxu0 0
    %211 = vmatprep.mubr.bf16.mxu0 0
    %212 = vmatmul.mubr.bf16.gmra.mxu0 %v177
    %v213 = vpop.f32.mrf.mxu0
    %v214 = vadd.f32 %v149, %v213
    %v215 = vpop.f32.mrf.mxu0
    %v216 = vpop.f32.mrf.mxu0
    %v217 = vadd.f32 %v149, %v216
    %v218 = vpop.f32.mrf.mxu0
    %219 = vdwg.mxu0
    %220 = vst [vmem:[%s5] sm:$0xff] %v214
    %221 = vst [vmem:[%s5 + $0x8] sm:$0xff] %v217
    // Predicated region
    $region34: #{apply_head.1} parent=1 // pred_check
      _
    $region35: #{apply_head.1} parent=1 // pred_check_branch
      %223 = sbr.rel (0) target = $region37
    $region36: #{apply_head.1} parent=1 // pred_region
      _
    $region37: #{apply_head.1} parent=1 // pred_fallthru
      _
    // Predicated region
    $region38: #{apply_head.1} parent=1 // pred_check
      _
    $region39: #{apply_head.1} parent=1 // pred_check_branch
      %225 = sbr.rel (0) target = $region41
    $region40: #{apply_head.1} parent=1 // pred_region
      _
    $region41: #{apply_head.1} parent=1 // pred_fallthru
      _
    %226 = vsyncpa [#allocation3], 1
    %227 = vsyncpa [#allocation5], 1

</llo_original>
